<compile_context>
chip_gen: v7x
topology: tpu7x:2x2x1
jax: 0.10.0
libtpu: 0.0.40
codegen_flags: <defaults>
</compile_context>

<pallas_src>
import functools

import jax
import jax.numpy as jnp
from jax.experimental import pallas as pl
from jax.experimental.pallas import tpu as pltpu


def _round_up(x, m):
    return (x + m - 1) // m * m


def _pick_tile(dim, preferred):
    """Largest multiple of 128 <= preferred that divides `dim`.

    `dim` is always a multiple of 128 here; when it is also a multiple of 256
    (the prepare-time padding guarantees this for dim > 128) the result is
    >= 256, so the 256x256 MXU on v6e/v7x is never quarter-filled.
    """
    t = min(preferred, dim)
    t = (t // 128) * 128
    while dim % t != 0:
        t -= 128
    return t


def _pick_tm(M, tm_max):
    """Row tile + padded row count, bounding padding waste (<= ~25%)."""
    m8 = _round_up(M, 8)
    if m8 <= tm_max:
        return m8, m8
    t = tm_max
    while t > 128 and _round_up(M, t) - M > M // 4:
        t //= 2
    return t, _round_up(M, t)


def _resblock_kernel_accout(x_mm_ref, wt_ref, b_ref, x_res_ref, o_ref):
    # f32 output path: accumulate the matmul directly into the output block
    # (resident across the K grid axis since its index_map ignores k).
    # x_mm_ref : [TM, TK] bf16   activation slice feeding the matmul
    # wt_ref   : [TK, TN] bf16   W^T tile
    # b_ref    : [1,  TN] f32    bias slice
    # x_res_ref: [TM, TN] f32    activation slice for the residual add
    # o_ref    : [TM, TN] f32    output tile (doubles as accumulator)
    k = pl.program_id(2)

    @pl.when(k == 0)
    def _init():
        o_ref[...] = jnp.zeros_like(o_ref)

    o_ref[...] += jnp.dot(x_mm_ref[...], wt_ref[...],
                          preferred_element_type=jnp.float32)

    @pl.when(k == pl.num_programs(2) - 1)
    def _finalize():
        h = o_ref[...] + b_ref[...]              # bias broadcast over rows
        o_ref[...] = x_res_ref[...].astype(jnp.float32) + h * jax.nn.sigmoid(h)


def _resblock_kernel_scratch(x_mm_ref, wt_ref, b_ref, x_res_ref, o_ref,
                             acc_ref):
    # Non-f32 output (e.g. bf16): keep an f32 VMEM accumulator scratch so the
    # reduction stays in full precision, write the narrow dtype only once.
    k = pl.program_id(2)

    @pl.when(k == 0)
    def _init():
        acc_ref[...] = jnp.zeros_like(acc_ref)

    acc_ref[...] += jnp.dot(x_mm_ref[...], wt_ref[...],
                            preferred_element_type=jnp.float32)

    @pl.when(k == pl.num_programs(2) - 1)
    def _finalize():
        h = acc_ref[...] + b_ref[...]
        o_ref[...] = (x_res_ref[...].astype(jnp.float32)
                      + h * jax.nn.sigmoid(h)).astype(o_ref.dtype)


def prepare_resblock_params(weight, bias, hidden_pad=None):
    """One-time param prep: transpose, cast to bf16, pad to a tile-friendly,
    lane-dense hidden size (multiple of 256, or 128 for tiny H).

    weight: [H, H] PyTorch Linear layout (out, in); bias: [H].
    Returns (W^T padded bf16 [Hp, Hp], bias padded f32 [1, Hp]).
    """
    H = weight.shape[0]
    if hidden_pad is None:
        hidden_pad = 128 if H <= 128 else _round_up(H, 256)
    assert hidden_pad >= H and hidden_pad % 128 == 0, \
        "hidden_pad must be a multiple of 128 and >= hidden_size"
    wt = weight.T.astype(jnp.bfloat16)
    b = bias.astype(jnp.float32)
    if hidden_pad > H:
        wt = jnp.pad(wt, ((0, hidden_pad - H), (0, hidden_pad - H)))
        b = jnp.pad(b, (0, hidden_pad - H))
    return wt, b.reshape(1, hidden_pad)


@functools.partial(jax.jit, static_argnames=("tm_max", "tn_max", "tk_max"))
def resblock_forward(x, wt_pad, b_pad, *, tm_max=1024, tn_max=1024,
                     tk_max=512):
    """x: [..., H]; wt_pad/b_pad from prepare_resblock_params."""
    orig_shape = x.shape
    H = orig_shape[-1]
    Hp = wt_pad.shape[0]
    out_dtype = x.dtype

    x2d = x.reshape(-1, H)
    M = x2d.shape[0]

    TM, Mp = _pick_tm(M, tm_max)
    TN = _pick_tile(Hp, tn_max)
    TK = _pick_tile(Hp, tk_max)

    # v7x megacore: keep >=2 blocks along the parallel (M, N) axes when
    # possible so both TensorCores get work. No-op perf-wise on v5e/v6e.
    if Mp // TM == 1 and Hp // TN == 1 and TN >= 256:
        TN //= 2

    # Pad only when needed (skip the extra HBM pass for aligned shapes).
    if Mp > M or Hp > H:
        xp = jnp.pad(x2d, ((0, Mp - M), (0, Hp - H)))
    else:
        xp = x2d
    # Matmul stream in bf16 (dominant, re-read Hp/TN times); residual stream
    # keeps the caller's dtype so the skip connection is exact.
    x_mm = xp if xp.dtype == jnp.bfloat16 else xp.astype(jnp.bfloat16)
    x_res = xp

    grid = (Mp // TM, Hp // TN, Hp // TK)
    grid_m, grid_n, grid_k = grid

    use_scratch = out_dtype != jnp.float32
    kernel = _resblock_kernel_scratch if use_scratch else _resblock_kernel_accout
    scratch = [pltpu.VMEM((TM, TN), jnp.float32)] if use_scratch else []

    xmm_b = x_mm.dtype.itemsize
    xres_b = x_res.dtype.itemsize
    out_b = jnp.dtype(out_dtype).itemsize
    cost = pl.CostEstimate(
        flops=2 * Mp * Hp * Hp,
        transcendentals=Mp * Hp,
        bytes_accessed=(grid_n * Mp * Hp * xmm_b      # x_mm re-read per N tile
                        + grid_m * Hp * Hp * 2        # W^T re-read per M tile
                        + Mp * Hp * xres_b            # residual stream
                        + Hp * 4                      # bias
                        + Mp * Hp * out_b),           # output writeback
    )

    out = pl.pallas_call(
        kernel,
        out_shape=jax.ShapeDtypeStruct((Mp, Hp), out_dtype),
        grid=grid,
        in_specs=[
            pl.BlockSpec((TM, TK), lambda i, j, k: (i, k)),   # x (matmul, bf16)
            pl.BlockSpec((TK, TN), lambda i, j, k: (k, j)),   # W^T (bf16)
            pl.BlockSpec((1, TN), lambda i, j, k: (0, j)),    # bias (f32)
            pl.BlockSpec((TM, TN), lambda i, j, k: (i, j)),   # x (residual)
        ],
        out_specs=pl.BlockSpec((TM, TN), lambda i, j, k: (i, j)),
        scratch_shapes=scratch,
        compiler_params=pltpu.CompilerParams(
            dimension_semantics=("parallel", "parallel", "arbitrary"),
            vmem_limit_bytes=64 * 1024 * 1024),
        cost_estimate=cost,
    )(x_mm, wt_pad, b_pad, x_res)

    if Mp > M or Hp > H:
        out = out[:M, :H]
    return out.reshape(orig_shape)


if __name__ == "__main__":
    key = jax.random.PRNGKey(0)
    k_x, k_b, k_x2, k_w2, k_x3, k_w3, k_b3 = jax.random.split(key, 7)

    # --- Small shapes consistent with the module: batch=2, seq=8, hidden=32 ---
    batch, seq, hidden = 2, 8, 32
    x = jax.random.normal(k_x, (batch, seq, hidden), dtype=jnp.float32)

    # Parameters mirroring the module's __init__: zero weight, default Linear
    # bias init U(-1/sqrt(H), 1/sqrt(H)) (seeded via JAX).
    weight = jnp.zeros((hidden, hidden), dtype=jnp.float32)
    bound = 1.0 / float(hidden) ** 0.5
    bias = jax.random.uniform(k_b, (hidden,), minval=-bound, maxval=bound,
                              dtype=jnp.float32)

    wt_pad, b_pad = prepare_resblock_params(weight, bias)
    out = jax.block_until_ready(resblock_forward(x, wt_pad, b_pad))

    h_ref = x @ weight.T + bias
    ref = x + h_ref * jax.nn.sigmoid(h_ref)
    assert out.dtype == x.dtype
    assert jnp.allclose(out, ref, atol=1e-5, rtol=1e-5), "mismatch (module init)"

    # --- Non-zero weights, H=640 (padded to 768): exercises multi-step K/N
    # tiling, the f32 accumulate-into-output path, and the megacore TN split.
    hidden2, rows2 = 640, 24
    x2 = jax.random.normal(k_x2, (rows2, hidden2), dtype=jnp.float32)
    w2 = (jax.random.normal(k_w2, (hidden2, hidden2), dtype=jnp.float32)
          / float(hidden2) ** 0.5)
    b2 = jax.random.uniform(k_b, (hidden2,), minval=-0.1, maxval=0.1,
                            dtype=jnp.float32)
    wt2_pad, b2_pad = prepare_resblock_params(w2, b2)
    out2 = jax.block_until_ready(resblock_forward(x2, wt2_pad, b2_pad))

    h2 = x2 @ w2.T + b2
    ref2 = x2 + h2 * jax.nn.sigmoid(h2)
    # bf16 MXU matmul with f32 accumulation -> loose-but-safe tolerance.
    assert jnp.allclose(out2, ref2, atol=5e-2, rtol=5e-2), \
        "mismatch (tiled path, f32 residual/output)"

    # --- bf16 activations: exercises the f32-acc-scratch kernel variant and
    # bf16 output writeback (output dtype follows x.dtype).
    hidden3, rows3 = 256, 40
    x3 = jax.random.normal(k_x3, (rows3, hidden3), dtype=jnp.float32)
    w3 = (jax.random.normal(k_w3, (hidden3, hidden3), dtype=jnp.float32)
          / float(hidden3) ** 0.5)
    b3 = jax.random.uniform(k_b3, (hidden3,), minval=-0.1, maxval=0.1,
                            dtype=jnp.float32)
    wt3_pad, b3_pad = prepare_resblock_params(w3, b3)
    out3 = jax.block_until_ready(
        resblock_forward(x3.astype(jnp.bfloat16), wt3_pad, b3_pad))

    h3 = x3 @ w3.T + b3
    ref3 = x3 + h3 * jax.nn.sigmoid(h3)
    assert out3.dtype == jnp.bfloat16
    assert jnp.allclose(out3.astype(jnp.float32), ref3, atol=1e-1, rtol=1e-1), \
        "mismatch (bf16 activation path)"

    print("KERNEL_OK")
</pallas_src>

<mosaic_0001>
module attributes {stable_mosaic.version = 11 : i64} {
  func.func @_resblock_kernel_accout(%arg0: i32, %arg1: i32, %arg2: i32, %arg3: memref<16x128xbf16, #tpu.memory_space<vmem>>, %arg4: memref<128x128xbf16, #tpu.memory_space<vmem>>, %arg5: memref<1x128xf32, #tpu.memory_space<vmem>>, %arg6: memref<16x128xf32, #tpu.memory_space<vmem>>, %arg7: memref<16x128xf32, #tpu.memory_space<vmem>>) attributes {dimension_semantics = [#tpu.dimension_semantics<parallel>, #tpu.dimension_semantics<parallel>, #tpu.dimension_semantics<arbitrary>], iteration_bounds = array<i64: 1, 1, 1>, scalar_prefetch = 0 : i64, scratch_operands = 0 : i64, tpu.core_type = #tpu.core_type<tc>, window_params = [{transform_indices = @transform_0, window_bounds = array<i64: 16, 128>}, {transform_indices = @transform_1, window_bounds = array<i64: 128, 128>}, {transform_indices = @transform_2, window_bounds = array<i64: 1, 128>}, {transform_indices = @transform_3, window_bounds = array<i64: 16, 128>}, {transform_indices = @transform_4, window_bounds = array<i64: 16, 128>}]} {
    %c0_i32 = arith.constant 0 : i32
    %0 = arith.cmpi eq, %arg2, %c0_i32 : i32
    %1 = arith.extui %0 : i1 to i32
    %c0_i32_0 = arith.constant 0 : i32
    %2 = arith.cmpi ne, %1, %c0_i32_0 : i32
    scf.if %2 {
      %cst_10 = arith.constant 0.000000e+00 : f32
      %12 = vector.broadcast %cst_10 : f32 to vector<16x128xf32>
      %c0_11 = arith.constant 0 : index
      %c0_12 = arith.constant 0 : index
      %13 = vector.load %arg7[%c0_11, %c0_12] : memref<16x128xf32, #tpu.memory_space<vmem>>, vector<16x128xf32>
      tpu.vector_store %arg7[%c0_11, %c0_12], %12 {strides = array<i32>} : memref<16x128xf32, #tpu.memory_space<vmem>>, vector<16x128xf32>,
    } else {
    }
    %c0 = arith.constant 0 : index
    %c0_1 = arith.constant 0 : index
    %3 = vector.load %arg7[%c0, %c0_1] : memref<16x128xf32, #tpu.memory_space<vmem>>, vector<16x128xf32>
    %c0_2 = arith.constant 0 : index
    %c0_3 = arith.constant 0 : index
    %4 = vector.load %arg3[%c0_2, %c0_3] : memref<16x128xbf16, #tpu.memory_space<vmem>>, vector<16x128xbf16>
    %c0_4 = arith.constant 0 : index
    %c0_5 = arith.constant 0 : index
    %5 = vector.load %arg4[%c0_4, %c0_5] : memref<128x128xbf16, #tpu.memory_space<vmem>>, vector<128x128xbf16>
    %cst = arith.constant dense<0.000000e+00> : vector<16x128xf32>
    %6 = tpu.matmul %4, %5, %cst {dimension_numbers = #tpu.dot_dimension_numbers<[1], [0], [0], [1], [0, 0, 1, 1], [], []>} : vector<16x128xbf16>, vector<128x128xbf16>, vector<16x128xf32> -> vector<16x128xf32>
    %7 = arith.addf %3, %6 : vector<16x128xf32>
    %c0_6 = arith.constant 0 : index
    %c0_7 = arith.constant 0 : index
    %8 = vector.load %arg7[%c0_6, %c0_7] : memref<16x128xf32, #tpu.memory_space<vmem>>, vector<16x128xf32>
    tpu.vector_store %arg7[%c0_6, %c0_7], %7 {strides = array<i32>} : memref<16x128xf32, #tpu.memory_space<vmem>>, vector<16x128xf32>,
    %c0_i32_8 = arith.constant 0 : i32
    %9 = arith.cmpi eq, %arg2, %c0_i32_8 : i32
    %10 = arith.extui %9 : i1 to i32
    %c0_i32_9 = arith.constant 0 : i32
    %11 = arith.cmpi ne, %10, %c0_i32_9 : i32
    scf.if %11 {
      %c0_10 = arith.constant 0 : index
      %c0_11 = arith.constant 0 : index
      %12 = vector.load %arg7[%c0_10, %c0_11] : memref<16x128xf32, #tpu.memory_space<vmem>>, vector<16x128xf32>
      %c0_12 = arith.constant 0 : index
      %c0_13 = arith.constant 0 : index
      %13 = vector.load %arg5[%c0_12, %c0_13] : memref<1x128xf32, #tpu.memory_space<vmem>>, vector<1x128xf32>
      %14 = vector.broadcast %13 : vector<1x128xf32> to vector<16x128xf32>
      %15 = arith.addf %12, %14 : vector<16x128xf32>
      %c0_14 = arith.constant 0 : index
      %c0_15 = arith.constant 0 : index
      %16 = vector.load %arg6[%c0_14, %c0_15] : memref<16x128xf32, #tpu.memory_space<vmem>>, vector<16x128xf32>
      %17 = arith.negf %15 : vector<16x128xf32>
      %18 = math.exp %17 : vector<16x128xf32>
      %cst_16 = arith.constant 1.000000e+00 : f32
      %19 = vector.broadcast %cst_16 : f32 to vector<16x128xf32>
      %20 = arith.addf %19, %18 : vector<16x128xf32>
      %21 = arith.divf %19, %20 : vector<16x128xf32>
      %22 = arith.mulf %15, %21 : vector<16x128xf32>
      %23 = arith.addf %16, %22 : vector<16x128xf32>
      %c0_17 = arith.constant 0 : index
      %c0_18 = arith.constant 0 : index
      %24 = vector.load %arg7[%c0_17, %c0_18] : memref<16x128xf32, #tpu.memory_space<vmem>>, vector<16x128xf32>
      tpu.vector_store %arg7[%c0_17, %c0_18], %23 {strides = array<i32>} : memref<16x128xf32, #tpu.memory_space<vmem>>, vector<16x128xf32>,
    } else {
    }
    return
  }
  func.func @transform_0(%arg0: i32, %arg1: i32, %arg2: i32) -> (i32, i32) {
    %c0_i32 = arith.constant 0 : i32
    return %arg0, %arg2 : i32, i32
  }
  func.func @transform_1(%arg0: i32, %arg1: i32, %arg2: i32) -> (i32, i32) {
    %c0_i32 = arith.constant 0 : i32
    return %arg2, %arg1 : i32, i32
  }
  func.func @transform_2(%arg0: i32, %arg1: i32, %arg2: i32) -> (i32, i32) {
    %c0_i32 = arith.constant 0 : i32
    %c0_i32_0 = arith.constant 0 : i32
    return %c0_i32, %arg1 : i32, i32
  }
  func.func @transform_3(%arg0: i32, %arg1: i32, %arg2: i32) -> (i32, i32) {
    %c0_i32 = arith.constant 0 : i32
    return %arg0, %arg1 : i32, i32
  }
  func.func @transform_4(%arg0: i32, %arg1: i32, %arg2: i32) -> (i32, i32) {
    %c0_i32 = arith.constant 0 : i32
    return %arg0, %arg1 : i32, i32
  }
}

</mosaic_0001>

<llo_original>
// kernel: resblock_forward.1
$region0: #{resblock_forward.1}
  #allocation0 [shape = 'u32[]', space=smem, size = 0x4, offset = 0x4, fixed_abs, tag = 'smem constant byte address 0x4 - core index']
  #allocation1 [shape = 'u32[144,128]{1,0:T(1,128)}', space=vmem, size = 0x12000, scoped, tag = 'internal scratch']
  %s0 = inlined_call_operand.hbm [shape: bf16[16,128], index: 0, kind: input, shape index: {}]
  %s1 = inlined_call_operand.hbm [shape: bf16[128,128], index: 1, kind: input, shape index: {}]
  %s2 = inlined_call_operand.hbm [shape: f32[1,128], index: 2, kind: input, shape index: {}]
  %s3 = inlined_call_operand.hbm [shape: f32[16,128], index: 3, kind: input, shape index: {}]
  %s4 = inlined_call_operand.hbm [shape: f32[16,128], index: 4, kind: output, shape index: {}]
  %s5 = sld [smem:[#allocation0]]
  $region50: #{resblock_forward.1} parent=0
    _
  %s7 = ssub.s32 1, %s5
  %s8 = scalar_select 0, %s7, %s5
  $region1: #{resblock_forward.1} parent=0
    #allocation2 [shape = 'u8[4096]{0}', space=vmem, size = 0x1000, scoped, tag = 'input window, operand 0, single buffered']
    #allocation3 [shape = 's32[1]{0}', space=sflag, size = 0x4, scoped, tag = 'scoped memory for resblock_forward.1']
    #allocation4 [shape = 's32[1]{0}', space=sflag, size = 0x4, scoped, tag = 'scoped memory for resblock_forward.1']
    #allocation5 [shape = 'u8[32768]{0}', space=vmem, size = 0x8000, scoped, tag = 'input window, operand 1, single buffered']
    #allocation6 [shape = 's32[1]{0}', space=sflag, size = 0x4, scoped, tag = 'scoped memory for resblock_forward.1']
    #allocation7 [shape = 'u8[512]{0}', space=vmem, size = 0x400, scoped, tag = 'input window, operand 2, single buffered']
    #allocation8 [shape = 'u8[8192]{0}', space=vmem, size = 0x2000, scoped, tag = 'input window, operand 3, single buffered']
    #allocation9 [shape = 's32[1]{0}', space=sflag, size = 0x4, scoped, tag = 'scoped memory for resblock_forward.1']
    #allocation10 [shape = 'u8[8192]{0}', space=vmem, size = 0x2000, scoped, tag = 'output window, operand 0, single buffered']
    %9 = vsyncpa [#allocation3], 0
    %10 = vsyncpa [#allocation6], 0
    %11 = vsyncpa [#allocation9], 0
    %12 = vsyncpa [#allocation4], 0
    // Predicated region
    $region2: #{resblock_forward.1} parent=1 // pred_check
      _
    $region3: #{resblock_forward.1} parent=1 // pred_check_branch
      %14 = sbr.rel (0) target = $region5
    $region4: #{resblock_forward.1} parent=1 // pred_region
      %s16 = ssub.s32 128, 128
      %17 = vsyncadd [#allocation3], %s16
      %s18 = sshll.u32 [#allocation2], 4
      %s19 = int_to_ptr.vmem [resolvable:$true] %s18
      %24 = dma.hbm_to_vmem [thread:$0]  %s0, 128, %s19, [#allocation3], 64, 64, 4
    $region5: #{resblock_forward.1} parent=1 // pred_fallthru
      _
    // Predicated region
    $region6: #{resblock_forward.1} parent=1 // pred_check
      _
    $region7: #{resblock_forward.1} parent=1 // pred_check_branch
      %26 = sbr.rel (0) target = $region9
    $region8: #{resblock_forward.1} parent=1 // pred_region
      %s28 = ssub.s32 1024, 1024
      %29 = vsyncadd [#allocation6], %s28
      %s30 = sshll.u32 [#allocation5], 4
      %s31 = int_to_ptr.vmem [resolvable:$true] %s30
      %36 = dma.hbm_to_vmem [thread:$0]  %s1, 1024, %s31, [#allocation6], 64, 64, 4
    $region9: #{resblock_forward.1} parent=1 // pred_fallthru
      _
    // Predicated region
    $region10: #{resblock_forward.1} parent=1 // pred_check
      _
    $region11: #{resblock_forward.1} parent=1 // pred_check_branch
      %38 = sbr.rel (0) target = $region13
    $region12: #{resblock_forward.1} parent=1 // pred_region
      %s40 = ssub.s32 16, 16
      %41 = vsyncadd [#allocation6], %s40
      %s43 = sshll.u32 [#allocation7], 4
      %s44 = int_to_ptr.vmem [resolvable:$true] %s43
      %46 = dma.hbm_to_vmem [thread:$0]  %s2, 16, %s44, [#allocation6]
    $region13: #{resblock_forward.1} parent=1 // pred_fallthru
      _
    // Predicated region
    $region14: #{resblock_forward.1} parent=1 // pred_check
      _
    $region15: #{resblock_forward.1} parent=1 // pred_check_branch
      %48 = sbr.rel (0) target = $region17
    $region16: #{resblock_forward.1} parent=1 // pred_region
      %s50 = ssub.s32 256, 256
      %51 = vsyncadd [#allocation9], %s50
      %s52 = sshll.u32 [#allocation8], 4
      %s53 = int_to_ptr.vmem [resolvable:$true] %s52
      %58 = dma.hbm_to_vmem [thread:$0]  %s3, 256, %s53, [#allocation9], 128, 128, 8
    $region17: #{resblock_forward.1} parent=1 // pred_fallthru
      _
    // Predicated region
    $region18: #{resblock_forward.1} parent=1 // pred_check
      _
    $region19: #{resblock_forward.1} parent=1 // pred_check_branch
      %60 = sbr.rel (0) target = $region21
    $region20: #{resblock_forward.1} parent=1 // pred_region
      %61 = dma.done [#allocation3], 128
    $region21: #{resblock_forward.1} parent=1 // pred_fallthru
      _
    // Predicated region
    $region22: #{resblock_forward.1} parent=1 // pred_check
      _
    $region23: #{resblock_forward.1} parent=1 // pred_check_branch
      %63 = sbr.rel (0) target = $region25
    $region24: #{resblock_forward.1} parent=1 // pred_region
      %64 = dma.done [#allocation6], 1024
    $region25: #{resblock_forward.1} parent=1 // pred_fallthru
      _
    // Predicated region
    $region26: #{resblock_forward.1} parent=1 // pred_check
      _
    $region27: #{resblock_forward.1} parent=1 // pred_check_branch
      %66 = sbr.rel (0) target = $region29
    $region28: #{resblock_forward.1} parent=1 // pred_region
      %67 = dma.done [#allocation6], 16
    $region29: #{resblock_forward.1} parent=1 // pred_fallthru
      _
    // Predicated region
    $region30: #{resblock_forward.1} parent=1 // pred_check
      _
    $region31: #{resblock_forward.1} parent=1 // pred_check_branch
      %69 = sbr.rel (0) target = $region33
    $region32: #{resblock_forward.1} parent=1 // pred_region
      %70 = dma.done [#allocation9], 256
    $region33: #{resblock_forward.1} parent=1 // pred_fallthru
      _
    %p72 = scmp.eq.s32.totalorder 0, 0
    // Predicated region
    $region34: #{resblock_forward.1} parent=1 // pred_check
      %p73 = pneg %p72
    $region35: #{resblock_forward.1} parent=1 // pred_check_branch
      %75 = sbr.rel (%p73) target = $region37
    $region36: #{resblock_forward.1} parent=1 // pred_region
      %76 = vst [vmem:[#allocation10] sm:$0xff] 0.0
      %77 = vst [vmem:[#allocation10 + $0x8] sm:$0xff] 0.0
    $region37: #{resblock_forward.1} parent=1 // pred_fallthru
      _
    %v78 = vld [vmem:[#allocation10] sm:$0xff]
    %v79 = vld [vmem:[#allocation10 + $0x8] sm:$0xff]
    %v80 = vld [vmem:[#allocation2] sm:$0xf]
    %v81 = vld [vmem:[#allocation2 + $0x4] sm:$0xf]
    %v82 = vld [vmem:[#allocation5] sm:$0xf]
    %v83 = vld [vmem:[#allocation5 + $0x4] sm:$0xf]
    %v84 = vld [vmem:[#allocation5 + $0x8] sm:$0xf]
    %v85 = vld [vmem:[#allocation5 + $0xc] sm:$0xf]
    %v86 = vld [vmem:[#allocation5 + $0x10] sm:$0xf]
    %v87 = vld [vmem:[#allocation5 + $0x14] sm:$0xf]
    %v88 = vld [vmem:[#allocation5 + $0x18] sm:$0xf]
    %v89 = vld [vmem:[#allocation5 + $0x1c] sm:$0xf]
    %v90 = vld [vmem:[#allocation5 + $0x20] sm:$0xf]
    %v91 = vld [vmem:[#allocation5 + $0x24] sm:$0xf]
    %v92 = vld [vmem:[#allocation5 + $0x28] sm:$0xf]
    %v93 = vld [vmem:[#allocation5 + $0x2c] sm:$0xf]
    %v94 = vld [vmem:[#allocation5 + $0x30] sm:$0xf]
    %v95 = vld [vmem:[#allocation5 + $0x34] sm:$0xf]
    %v96 = vld [vmem:[#allocation5 + $0x38] sm:$0xf]
    %v97 = vld [vmem:[#allocation5 + $0x3c] sm:$0xf]
    %v100 = vunpack.c.l.b16 %v80
    %v101 = vunpack.c.l.b16 %v81
    %v102 = vpack.c.b16 %v101, %v100
    %v120 = vunpack.c.l.b16 %v82
    %v121 = vunpack.c.l.b16 %v83
    %v122 = vunpack.c.l.b16 %v84
    %v123 = vunpack.c.l.b16 %v85
    %v124 = vunpack.c.l.b16 %v86
    %v125 = vunpack.c.l.b16 %v87
    %v126 = vunpack.c.l.b16 %v88
    %v127 = vunpack.c.l.b16 %v89
    %v128 = vunpack.c.l.b16 %v90
    %v129 = vunpack.c.l.b16 %v91
    %v130 = vunpack.c.l.b16 %v92
    %v131 = vunpack.c.l.b16 %v93
    %v132 = vunpack.c.l.b16 %v94
    %v133 = vunpack.c.l.b16 %v95
    %v134 = vunpack.c.l.b16 %v96
    %v135 = vunpack.c.l.b16 %v97
    %v136 = vpack.c.b16 %v121, %v120
    %v137 = vpack.c.b16 %v123, %v122
    %v138 = vpack.c.b16 %v125, %v124
    %v139 = vpack.c.b16 %v127, %v126
    %v140 = vpack.c.b16 %v129, %v128
    %v141 = vpack.c.b16 %v131, %v130
    %v142 = vpack.c.b16 %v133, %v132
    %v143 = vpack.c.b16 %v135, %v134
    %152 = vmatprep.subr.bf16.mxu0 0
    %153 = vmatpush1.bf16.msra.mxu0 %v136
    %154 = vmatprep.subr.bf16.mxu0 0
    %155 = vmatpush1.bf16.msra.mxu0 %v137
    %156 = vmatprep.subr.bf16.mxu0 0
    %157 = vmatpush1.bf16.msra.mxu0 %v138
    %158 = vmatprep.subr.bf16.mxu0 0
    %159 = vmatpush1.bf16.msra.mxu0 %v139
    %160 = vmatprep.subr.bf16.mxu0 0
    %161 = vmatpush1.bf16.msra.mxu0 %v140
    %162 = vmatprep.subr.bf16.mxu0 0
    %163 = vmatpush1.bf16.msra.mxu0 %v141
    %164 = vmatprep.subr.bf16.mxu0 0
    %165 = vmatpush1.bf16.msra.mxu0 %v142
    %166 = vmatprep.subr.bf16.mxu0 0
    %167 = vmatpush1.bf16.msra.mxu0 %v143
    %168 = vmatprep.subr.bf16.mxu0 0
    %169 = vmatpush1.bf16.msra.mxu0 0
    %170 = vmatprep.subr.bf16.mxu0 0
    %171 = vmatpush1.bf16.msra.mxu0 0
    %172 = vmatprep.subr.bf16.mxu0 0
    %173 = vmatpush1.bf16.msra.mxu0 0
    %174 = vmatprep.subr.bf16.mxu0 0
    %175 = vmatpush1.bf16.msra.mxu0 0
    %176 = vmatprep.subr.bf16.mxu0 0
    %177 = vmatpush1.bf16.msra.mxu0 0
    %178 = vmatprep.subr.bf16.mxu0 0
    %179 = vmatpush1.bf16.msra.mxu0 0
    %180 = vmatprep.subr.bf16.mxu0 0
    %181 = vmatpush1.bf16.msra.mxu0 0
    %182 = vmatprep.subr.bf16.mxu0 0
    %183 = vmatpush1.bf16.msra.mxu0 0
    %184 = vmatprep.mubr.bf16.mxu0 0
    %185 = vmatmul.mubr.bf16.gmra.mrb[0].mxu0 %v102
    %v186 = vpop.f32.mrb[0].mxu0
    %v187 = vadd.f32 0.0, %v186
    %v188 = vpop.f32.mrb[0].mxu0
    %v189 = vpop.f32.mrb[0].mxu0
    %v190 = vadd.f32 0.0, %v189
    %v191 = vpop.f32.mrb[0].mxu0
    %192 = vdwg.mxu0
    %v193 = vadd.f32 %v78, %v187
    %v194 = vadd.f32 %v79, %v190
    %195 = vst [vmem:[#allocation10] sm:$0xff] %v193
    %196 = vst [vmem:[#allocation10 + $0x8] sm:$0xff] %v194
    // Predicated region
    $region38: #{resblock_forward.1} parent=1 // pred_check
      %p197 = pneg %p72
    $region39: #{resblock_forward.1} parent=1 // pred_check_branch
      %199 = sbr.rel (%p197) target = $region41
    $region40: #{resblock_forward.1} parent=1 // pred_region
      %v200 = vld [vmem:[#allocation10] sm:$0xff]
      %v201 = vld [vmem:[#allocation10 + $0x8] sm:$0xff]
      %v202 = vld [vmem:[#allocation7] sm:$0x1]
      %v204 = vlaneseq
      %v205 = vshrl.u32 %v204, 7
      %v206 = vsub.s32 0, %v205
      %v207 = vrot.slane %v202, %v206
      %v209 = vadd.f32 %v200, %v207
      %v210 = vadd.f32 %v201, %v207
      %v211 = vld [vmem:[#allocation8] sm:$0xff]
      %v212 = vld [vmem:[#allocation8 + $0x8] sm:$0xff]
      %v213 = vxor.u32 %v209, 2147483648
      %v214 = vxor.u32 %v210, 2147483648
      %v215 = vmul.f32 %v213, 1.442695
      %v216 = vpow.pop %v215
      %v217 = vmul.f32 %v214, 1.442695
      %v218 = vpow.pop %v217
      %v219 = vadd.f32 %v216, 1.0
      %v220 = vadd.f32 %v218, 1.0
      %v221 = vrcp.pop %v219
      %v222 = vmul.f32 1.0, %v221
      %v223 = vrcp.pop %v220
      %v224 = vmul.f32 1.0, %v223
      %v225 = vmul.f32 %v209, %v222
      %v226 = vmul.f32 %v210, %v224
      %v227 = vadd.f32 %v211, %v225
      %v228 = vadd.f32 %v212, %v226
      %229 = vst [vmem:[#allocation10] sm:$0xff] %v227
      %230 = vst [vmem:[#allocation10 + $0x8] sm:$0xff] %v228
    $region41: #{resblock_forward.1} parent=1 // pred_fallthru
      _
    // Predicated region
    $region42: #{resblock_forward.1} parent=1 // pred_check
      _
    $region43: #{resblock_forward.1} parent=1 // pred_check_branch
      %232 = sbr.rel (0) target = $region45
    $region44: #{resblock_forward.1} parent=1 // pred_region
      %s234 = ssub.s32 256, 256
      %235 = vsyncadd [#allocation4], %s234
      %s236 = sshll.u32 [#allocation10], 4
      %s237 = int_to_ptr.vmem [resolvable:$true] %s236
      %242 = dma.vmem_to_hbm [thread:$0]  %s237, 256, %s4, [#allocation4], 128, 128, 8
    $region45: #{resblock_forward.1} parent=1 // pred_fallthru
      _
    // Predicated region
    $region46: #{resblock_forward.1} parent=1 // pred_check
      _
    $region47: #{resblock_forward.1} parent=1 // pred_check_branch
      %244 = sbr.rel (0) target = $region49
    $region48: #{resblock_forward.1} parent=1 // pred_region
      %245 = dma.done [#allocation4], 256
    $region49: #{resblock_forward.1} parent=1 // pred_fallthru
      _
    %246 = vsyncpa [#allocation3], 1
    %247 = vsyncpa [#allocation6], 1
    %248 = vsyncpa [#allocation9], 1
    %249 = vsyncpa [#allocation4], 1

</llo_original>
